<compile_context>
chip_gen: v5e
topology: v5e:2x2
jax: 0.10.0
libtpu: 0.0.40
codegen_flags: <defaults>
</compile_context>

<pallas_src>
import jax
import jax.numpy as jnp
from jax.experimental import pallas as pl
from jax.experimental.pallas import tpu as pltpu

VOCAB_SIZE = 3000
EMB_DIM = 128
HID_DIM = 64
GATE_DIM = 4 * HID_DIM  # 256, PyTorch gate order i, f, g, o


# ---------------------------------------------------------------------------
# Kernel 1: batched input projection  (T*B, 128) @ (128, 256) + bias -> bf16
# ---------------------------------------------------------------------------
def input_proj_kernel(x_ref, w_ref, b_ref, out_ref):
    acc = jnp.dot(x_ref[...], w_ref[...], preferred_element_type=jnp.float32)
    out_ref[...] = (acc + b_ref[...]).astype(out_ref.dtype)


def _pick_row_tile(rows):
    for cand in (512, 256, 128):
        if rows % cand == 0:
            return cand
    return rows  # single full block (always layout-legal)


def input_projection(x_flat_bf16, w_ih_t_bf16, bias_f32):
    rows, e = x_flat_bf16.shape
    rt = _pick_row_tile(rows)
    return pl.pallas_call(
        input_proj_kernel,
        out_shape=jax.ShapeDtypeStruct((rows, GATE_DIM), jnp.bfloat16),
        grid_spec=pltpu.PrefetchScalarGridSpec(
            num_scalar_prefetch=0,
            grid=(rows // rt,),
            in_specs=[
                pl.BlockSpec((rt, e), lambda r: (r, 0)),
                pl.BlockSpec((e, GATE_DIM), lambda r: (0, 0)),
                pl.BlockSpec((1, GATE_DIM), lambda r: (0, 0)),
            ],
            out_specs=pl.BlockSpec((rt, GATE_DIM), lambda r: (r, 0)),
        ),
        compiler_params=pltpu.CompilerParams(
            dimension_semantics=("parallel",)),
    )(x_flat_bf16, w_ih_t_bf16, bias_f32)


# ---------------------------------------------------------------------------
# Kernel 2: LSTM recurrence over time (in-kernel fori_loop) + head reduction
# ---------------------------------------------------------------------------
def lstm_recurrence_kernel(xp_ref, whh_ref, wh_ref, bh_ref, out_ref):
    t_steps = xp_ref.shape[0]
    bt = xp_ref.shape[1]

    whh = whh_ref[...]  # (64, 256) f32, hoisted out of the loop

    def step(t, carry):
        h, c = carry
        xp_t = xp_ref[t].astype(jnp.float32)          # (BT, 256), bias already folded in
        gates = xp_t + jnp.dot(h, whh, preferred_element_type=jnp.float32)
        i_g = jax.nn.sigmoid(gates[:, 0 * HID_DIM:1 * HID_DIM])
        f_g = jax.nn.sigmoid(gates[:, 1 * HID_DIM:2 * HID_DIM])
        g_g = jnp.tanh(gates[:, 2 * HID_DIM:3 * HID_DIM])
        o_g = jax.nn.sigmoid(gates[:, 3 * HID_DIM:4 * HID_DIM])
        c_new = f_g * c + i_g * g_g
        h_new = o_g * jnp.tanh(c_new)
        return h_new, c_new

    h0 = jnp.zeros((bt, HID_DIM), jnp.float32)
    c0 = jnp.zeros((bt, HID_DIM), jnp.float32)
    h_fin, _ = jax.lax.fori_loop(0, t_steps, step, (h0, c0))

    # Head: Linear(64 -> 1) + sigmoid as a vector reduction (no 1-column matmul).
    logit = jnp.sum(h_fin * wh_ref[...], axis=-1, keepdims=True) + bh_ref[...]
    out_ref[...] = jax.nn.sigmoid(logit)               # (BT, 1)


def _pick_batch_tile(b):
    for cand in (64, 32, 16):
        if b % cand == 0 and b // cand >= 2:
            return cand
    return b  # single full-batch block


def lstm_recurrence(x_proj_tm, w_hh_t, w_head, b_head):
    t_steps, b, g = x_proj_tm.shape
    bt = _pick_batch_tile(b)
    # NOTE: the (T, BT, 256) bf16 slab must fit VMEM; for very long T this
    # should be chunked / streamed (pltpu.emit_pipeline) — fine at these sizes.
    return pl.pallas_call(
        lstm_recurrence_kernel,
        out_shape=jax.ShapeDtypeStruct((b, 1), jnp.float32),
        grid_spec=pltpu.PrefetchScalarGridSpec(
            num_scalar_prefetch=0,
            grid=(b // bt,),
            in_specs=[
                pl.BlockSpec((t_steps, bt, g), lambda i: (0, i, 0)),  # projected seq
                pl.BlockSpec((HID_DIM, g), lambda i: (0, 0)),          # W_hh^T
                pl.BlockSpec((1, HID_DIM), lambda i: (0, 0)),          # head weight
                pl.BlockSpec((1, 1), lambda i: (0, 0)),                # head bias
            ],
            out_specs=pl.BlockSpec((bt, 1), lambda i: (i, 0)),
        ),
        compiler_params=pltpu.CompilerParams(
            dimension_semantics=("parallel",)),
    )(x_proj_tm, w_hh_t, w_head, b_head)


# ---------------------------------------------------------------------------
# Model forward
# ---------------------------------------------------------------------------
def model_forward(tokens, params):
    """tokens: (B, T) int32 -> (B,) float32."""
    emb = params["embedding"]                       # (V, 128), row 0 zeroed
    x_emb = jnp.take(emb, tokens, axis=0)           # (B, T, 128)  -- glue: embedding gather
    x_tm = jnp.transpose(x_emb, (1, 0, 2))          # (T, B, 128) time-major
    t_steps, b, e = x_tm.shape

    # 1) batched input projection (+ fused bias), bf16 operands / output
    x_flat = x_tm.reshape(t_steps * b, e).astype(jnp.bfloat16)
    w_ih_t_bf16 = params["w_ih_t"].astype(jnp.bfloat16)
    x_proj_flat = input_projection(x_flat, w_ih_t_bf16, params["bias"])
    x_proj = x_proj_flat.reshape(t_steps, b, GATE_DIM)     # (T, B, 256) bf16

    # 2) serial LSTM recurrence + head, all inside one Pallas call
    out = lstm_recurrence(x_proj, params["w_hh_t"], params["w_head"],
                          params["b_head"])
    return out[:, 0]                                 # squeeze(1)


def init_params(key):
    ks = jax.random.split(key, 7)
    scale = 0.05
    embedding = scale * jax.random.normal(ks[0], (VOCAB_SIZE, EMB_DIM), jnp.float32)
    embedding = embedding.at[0].set(0.0)             # padding_idx=0
    # PyTorch LSTM params: weight_ih (4H, E), weight_hh (4H, H), biases (4H,)
    w_ih = scale * jax.random.normal(ks[1], (GATE_DIM, EMB_DIM), jnp.float32)
    w_hh = scale * jax.random.normal(ks[2], (GATE_DIM, HID_DIM), jnp.float32)
    b_ih = scale * jax.random.normal(ks[3], (GATE_DIM,), jnp.float32)
    b_hh = scale * jax.random.normal(ks[4], (GATE_DIM,), jnp.float32)
    # Head: Linear(64, 1)
    w_head = scale * jax.random.normal(ks[5], (1, HID_DIM), jnp.float32)
    b_head = scale * jax.random.normal(ks[6], (1,), jnp.float32)
    return {
        "embedding": embedding,
        "w_ih_t": jnp.transpose(w_ih),                  # (128, 256)
        "w_hh_t": jnp.transpose(w_hh),                  # (64, 256)
        "bias": (b_ih + b_hh).reshape(1, GATE_DIM),     # (1, 256), fused into x_proj
        "w_head": w_head,                               # (1, 64)
        "b_head": b_head.reshape(1, 1),                 # (1, 1)
    }


if __name__ == "__main__":
    key = jax.random.PRNGKey(0)
    params = init_params(key)

    B, T = 8, 16
    tok_key = jax.random.fold_in(key, 123)
    tokens = jax.random.randint(tok_key, (B, T), 0, VOCAB_SIZE, dtype=jnp.int32)

    out = jax.jit(model_forward)(tokens, params)
    out = jax.block_until_ready(out)
    assert out.shape == (B,), out.shape
    assert bool(jnp.all(jnp.isfinite(out)))
    assert bool(jnp.all((out > 0.0) & (out < 1.0)))   # sigmoid output range
    print("KERNEL_OK")
</pallas_src>

<mosaic_0001>
module attributes {stable_mosaic.version = 11 : i64} {
  func.func @input_proj_kernel(%arg0: i32, %arg1: memref<128x128xbf16, #tpu.memory_space<vmem>>, %arg2: memref<128x256xbf16, #tpu.memory_space<vmem>>, %arg3: memref<1x256xf32, #tpu.memory_space<vmem>>, %arg4: memref<128x256xbf16, #tpu.memory_space<vmem>>) attributes {dimension_semantics = [#tpu.dimension_semantics<parallel>], iteration_bounds = array<i64: 1>, scalar_prefetch = 0 : i64, scratch_operands = 0 : i64, tpu.core_type = #tpu.core_type<tc>, window_params = [{transform_indices = @transform_0, window_bounds = array<i64: 128, 128>}, {pipeline_mode = #tpu.pipeline_mode<synchronous>, transform_indices = @transform_1, window_bounds = array<i64: 128, 256>}, {pipeline_mode = #tpu.pipeline_mode<synchronous>, transform_indices = @transform_2, window_bounds = array<i64: 1, 256>}, {transform_indices = @transform_3, window_bounds = array<i64: 128, 256>}]} {
    %c0 = arith.constant 0 : index
    %c0_0 = arith.constant 0 : index
    %0 = vector.load %arg1[%c0, %c0_0] : memref<128x128xbf16, #tpu.memory_space<vmem>>, vector<128x128xbf16>
    %c0_1 = arith.constant 0 : index
    %c0_2 = arith.constant 0 : index
    %1 = vector.load %arg2[%c0_1, %c0_2] : memref<128x256xbf16, #tpu.memory_space<vmem>>, vector<128x256xbf16>
    %cst = arith.constant dense<0.000000e+00> : vector<128x256xf32>
    %2 = tpu.matmul %0, %1, %cst {dimension_numbers = #tpu.dot_dimension_numbers<[1], [0], [0], [1], [0, 0, 1, 1], [], []>} : vector<128x128xbf16>, vector<128x256xbf16>, vector<128x256xf32> -> vector<128x256xf32>
    %c0_3 = arith.constant 0 : index
    %c0_4 = arith.constant 0 : index
    %3 = vector.load %arg3[%c0_3, %c0_4] : memref<1x256xf32, #tpu.memory_space<vmem>>, vector<1x256xf32>
    %4 = vector.broadcast %3 : vector<1x256xf32> to vector<128x256xf32>
    %5 = arith.addf %2, %4 : vector<128x256xf32>
    %6 = arith.truncf %5 : vector<128x256xf32> to vector<128x256xbf16>
    %c0_5 = arith.constant 0 : index
    %c0_6 = arith.constant 0 : index
    %7 = vector.load %arg4[%c0_5, %c0_6] : memref<128x256xbf16, #tpu.memory_space<vmem>>, vector<128x256xbf16>
    tpu.vector_store %arg4[%c0_5, %c0_6], %6 {strides = array<i32>} : memref<128x256xbf16, #tpu.memory_space<vmem>>, vector<128x256xbf16>,
    return
  }
  func.func @transform_0(%arg0: i32) -> (i32, i32) {
    %c0_i32 = arith.constant 0 : i32
    %c0_i32_0 = arith.constant 0 : i32
    return %arg0, %c0_i32 : i32, i32
  }
  func.func @transform_1(%arg0: i32) -> (i32, i32) {
    %c0_i32 = arith.constant 0 : i32
    %c0_i32_0 = arith.constant 0 : i32
    %c0_i32_1 = arith.constant 0 : i32
    return %c0_i32, %c0_i32_0 : i32, i32
  }
  func.func @transform_2(%arg0: i32) -> (i32, i32) {
    %c0_i32 = arith.constant 0 : i32
    %c0_i32_0 = arith.constant 0 : i32
    %c0_i32_1 = arith.constant 0 : i32
    return %c0_i32, %c0_i32_0 : i32, i32
  }
  func.func @transform_3(%arg0: i32) -> (i32, i32) {
    %c0_i32 = arith.constant 0 : i32
    %c0_i32_0 = arith.constant 0 : i32
    return %arg0, %c0_i32 : i32, i32
  }
}

module attributes {stable_mosaic.version = 11 : i64} {
  func.func @lstm_recurrence_kernel(%arg0: i32, %arg1: memref<16x8x256xbf16, #tpu.memory_space<vmem>>, %arg2: memref<64x256xf32, #tpu.memory_space<vmem>>, %arg3: memref<1x64xf32, #tpu.memory_space<vmem>>, %arg4: memref<1x1xf32, #tpu.memory_space<vmem>>, %arg5: memref<8x1xf32, #tpu.memory_space<vmem>>) attributes {dimension_semantics = [#tpu.dimension_semantics<parallel>], iteration_bounds = array<i64: 1>, scalar_prefetch = 0 : i64, scratch_operands = 0 : i64, tpu.core_type = #tpu.core_type<tc>, window_params = [{transform_indices = @transform_0, window_bounds = array<i64: 16, 8, 256>}, {pipeline_mode = #tpu.pipeline_mode<synchronous>, transform_indices = @transform_1, window_bounds = array<i64: 64, 256>}, {pipeline_mode = #tpu.pipeline_mode<synchronous>, transform_indices = @transform_2, window_bounds = array<i64: 1, 64>}, {pipeline_mode = #tpu.pipeline_mode<synchronous>, transform_indices = @transform_3, window_bounds = array<i64: 1, 1>}, {transform_indices = @transform_4, window_bounds = array<i64: 8, 1>}]} {
    %c0 = arith.constant 0 : index
    %c0_0 = arith.constant 0 : index
    %0 = vector.load %arg2[%c0, %c0_0] : memref<64x256xf32, #tpu.memory_space<vmem>>, vector<64x256xf32>
    %cst = arith.constant 0.000000e+00 : f32
    %1 = vector.broadcast %cst : f32 to vector<8x64xf32>
    %cst_1 = arith.constant 0.000000e+00 : f32
    %2 = vector.broadcast %cst_1 : f32 to vector<8x64xf32>
    %c0_i32 = arith.constant 0 : i32
    %c16_i32 = arith.constant 16 : i32
    %3 = arith.addi %c0_i32, %c16_i32 : i32
    %c1_i32 = arith.constant 1 : i32
    %4:2 = scf.for %arg6 = %c0_i32 to %3 step %c1_i32 iter_args(%arg7 = %1, %arg8 = %2) -> (vector<8x64xf32>, vector<8x64xf32>)  : i32 {
      %19 = arith.index_cast %arg6 : i32 to index
      %c0_11 = arith.constant 0 : index
      %c0_12 = arith.constant 0 : index
      %20 = vector.load %arg1[%19, %c0_11, %c0_12] : memref<16x8x256xbf16, #tpu.memory_space<vmem>>, vector<1x8x256xbf16>
      %21 = vector.shape_cast %20 : vector<1x8x256xbf16> to vector<8x256xbf16>
      %22 = arith.extf %21 : vector<8x256xbf16> to vector<8x256xf32>
      %cst_13 = arith.constant dense<0.000000e+00> : vector<8x256xf32>
      %23 = tpu.matmul %arg7, %0, %cst_13 {dimension_numbers = #tpu.dot_dimension_numbers<[1], [0], [0], [1], [0, 0, 1, 1], [], []>} : vector<8x64xf32>, vector<64x256xf32>, vector<8x256xf32> -> vector<8x256xf32>
      %24 = arith.addf %22, %23 : vector<8x256xf32>
      %25 = vector.extract_strided_slice %24 {offsets = [0, 0], sizes = [8, 64], strides = [1, 1]} : vector<8x256xf32> to vector<8x64xf32>
      %26 = arith.negf %25 : vector<8x64xf32>
      %27 = math.exp %26 : vector<8x64xf32>
      %cst_14 = arith.constant 1.000000e+00 : f32
      %28 = vector.broadcast %cst_14 : f32 to vector<8x64xf32>
      %29 = arith.addf %28, %27 : vector<8x64xf32>
      %30 = arith.divf %28, %29 : vector<8x64xf32>
      %31 = vector.extract_strided_slice %24 {offsets = [0, 64], sizes = [8, 64], strides = [1, 1]} : vector<8x256xf32> to vector<8x64xf32>
      %32 = arith.negf %31 : vector<8x64xf32>
      %33 = math.exp %32 : vector<8x64xf32>
      %cst_15 = arith.constant 1.000000e+00 : f32
      %34 = vector.broadcast %cst_15 : f32 to vector<8x64xf32>
      %35 = arith.addf %34, %33 : vector<8x64xf32>
      %36 = arith.divf %34, %35 : vector<8x64xf32>
      %37 = vector.extract_strided_slice %24 {offsets = [0, 128], sizes = [8, 64], strides = [1, 1]} : vector<8x256xf32> to vector<8x64xf32>
      %38 = math.tanh %37 : vector<8x64xf32>
      %39 = vector.extract_strided_slice %24 {offsets = [0, 192], sizes = [8, 64], strides = [1, 1]} : vector<8x256xf32> to vector<8x64xf32>
      %40 = arith.negf %39 : vector<8x64xf32>
      %41 = math.exp %40 : vector<8x64xf32>
      %cst_16 = arith.constant 1.000000e+00 : f32
      %42 = vector.broadcast %cst_16 : f32 to vector<8x64xf32>
      %43 = arith.addf %42, %41 : vector<8x64xf32>
      %44 = arith.divf %42, %43 : vector<8x64xf32>
      %45 = arith.mulf %36, %arg8 : vector<8x64xf32>
      %46 = arith.mulf %30, %38 : vector<8x64xf32>
      %47 = arith.addf %45, %46 : vector<8x64xf32>
      %48 = math.tanh %47 : vector<8x64xf32>
      %49 = arith.mulf %44, %48 : vector<8x64xf32>
      scf.yield %49, %47 : vector<8x64xf32>, vector<8x64xf32>
    }
    %c16_i32_2 = arith.constant 16 : i32
    %c0_3 = arith.constant 0 : index
    %c0_4 = arith.constant 0 : index
    %5 = vector.load %arg3[%c0_3, %c0_4] : memref<1x64xf32, #tpu.memory_space<vmem>>, vector<1x64xf32>
    %6 = vector.broadcast %5 : vector<1x64xf32> to vector<8x64xf32>
    %7 = arith.mulf %4#0, %6 : vector<8x64xf32>
    %cst_5 = arith.constant dense<0.000000e+00> : vector<8xf32>
    %8 = vector.multi_reduction <add>, %7, %cst_5 [1] : vector<8x64xf32> to vector<8xf32>
    %9 = vector.shape_cast %8 : vector<8xf32> to vector<8x1xf32>
    %c0_6 = arith.constant 0 : index
    %c0_7 = arith.constant 0 : index
    %10 = vector.load %arg4[%c0_6, %c0_7] : memref<1x1xf32, #tpu.memory_space<vmem>>, vector<1x1xf32>
    %11 = vector.broadcast %10 : vector<1x1xf32> to vector<8x1xf32>
    %12 = arith.addf %9, %11 : vector<8x1xf32>
    %13 = arith.negf %12 : vector<8x1xf32>
    %14 = math.exp %13 : vector<8x1xf32>
    %cst_8 = arith.constant 1.000000e+00 : f32
    %15 = vector.broadcast %cst_8 : f32 to vector<8x1xf32>
    %16 = arith.addf %15, %14 : vector<8x1xf32>
    %17 = arith.divf %15, %16 : vector<8x1xf32>
    %c0_9 = arith.constant 0 : index
    %c0_10 = arith.constant 0 : index
    %18 = vector.load %arg5[%c0_9, %c0_10] : memref<8x1xf32, #tpu.memory_space<vmem>>, vector<8x1xf32>
    tpu.vector_store %arg5[%c0_9, %c0_10], %17 {strides = array<i32>} : memref<8x1xf32, #tpu.memory_space<vmem>>, vector<8x1xf32>,
    return
  }
  func.func @transform_0(%arg0: i32) -> (i32, i32, i32) {
    %c0_i32 = arith.constant 0 : i32
    %c0_i32_0 = arith.constant 0 : i32
    %c0_i32_1 = arith.constant 0 : i32
    return %c0_i32, %arg0, %c0_i32_0 : i32, i32, i32
  }
  func.func @transform_1(%arg0: i32) -> (i32, i32) {
    %c0_i32 = arith.constant 0 : i32
    %c0_i32_0 = arith.constant 0 : i32
    %c0_i32_1 = arith.constant 0 : i32
    return %c0_i32, %c0_i32_0 : i32, i32
  }
  func.func @transform_2(%arg0: i32) -> (i32, i32) {
    %c0_i32 = arith.constant 0 : i32
    %c0_i32_0 = arith.constant 0 : i32
    %c0_i32_1 = arith.constant 0 : i32
    return %c0_i32, %c0_i32_0 : i32, i32
  }
  func.func @transform_3(%arg0: i32) -> (i32, i32) {
    %c0_i32 = arith.constant 0 : i32
    %c0_i32_0 = arith.constant 0 : i32
    %c0_i32_1 = arith.constant 0 : i32
    return %c0_i32, %c0_i32_0 : i32, i32
  }
  func.func @transform_4(%arg0: i32) -> (i32, i32) {
    %c0_i32 = arith.constant 0 : i32
    %c0_i32_0 = arith.constant 0 : i32
    return %arg0, %c0_i32 : i32, i32
  }
}

</mosaic_0001>

<llo_original>
// kernel: model_forward.3
$region0: #{model_forward.3}
  #allocation0 [shape = 'u32[]', space=smem, size = 0x4, offset = 0x4, fixed_abs, tag = 'smem constant byte address 0x4 - core index']
  #allocation1 [shape = 'u32[72,128]{1,0:T(1,128)}', space=vmem, size = 0x9000, scoped, tag = 'internal scratch']
  #allocation2 [shape = 'f32[1,1]{1,0:T(1,128)S(1)}', space=vmem, size = 0x200, scoped, tag = 'scoped memory for model_forward.3']
  %s0 = inlined_call_operand.vmem [shape: bf16[16,8,256], index: 0, kind: input, shape index: {}]
  %s1 = inlined_call_operand.hbm [shape: f32[64,256], index: 1, kind: input, shape index: {}]
  %s2 = inlined_call_operand.hbm [shape: f32[1,64], index: 2, kind: input, shape index: {}]
  %s3 = inlined_call_operand.<no memory space> [shape: f32[1,1], index: 3, kind: input, shape index: {}]
  %s4 = inlined_call_operand.vmem [shape: f32[8,1], index: 4, kind: output, shape index: {}]
  %s5 = sld [smem:[#allocation0]]
  $region41: #{model_forward.3} parent=0
    _
  %s7 = ssub.s32 1, %s5
  %s8 = scalar_select 0, %s7, %s5
  %v9 = vstv %s3
  %10 = vst [vmem:[#allocation2] sm:$0x1] %v9
  $region1: #{model_forward.3} parent=0
    #allocation3 [shape = 'u8[65536]{0}', space=vmem, size = 0x10000, scoped, tag = 'input window, operand 1, single buffered']
    #allocation4 [shape = 's32[1]{0}', space=sflag, size = 0x4, scoped, tag = 'scoped memory for model_forward.3']
    #allocation5 [shape = 'u8[512]{0}', space=vmem, size = 0x400, scoped, tag = 'input window, operand 2, single buffered']
    #allocation6 [shape = 's32[1]{0}', space=sflag, size = 0x4, scoped, tag = 'scoped memory for model_forward.3']
    %11 = vsyncpa [#allocation4], 0
    %12 = vsyncpa [#allocation6], 0
    // Predicated region
    $region2: #{model_forward.3} parent=1 // pred_check
      _
    $region3: #{model_forward.3} parent=1 // pred_check_branch
      %14 = sbr.rel (0) target = $region5
    $region4: #{model_forward.3} parent=1 // pred_region
      _
    $region5: #{model_forward.3} parent=1 // pred_fallthru
      _
    // Predicated region
    $region6: #{model_forward.3} parent=1 // pred_check
      _
    $region7: #{model_forward.3} parent=1 // pred_check_branch
      %16 = sbr.rel (0) target = $region9
    $region8: #{model_forward.3} parent=1 // pred_region
      %18 = vsyncadd [#allocation4], 0
      %s19 = sshll.u32 %s1, 4
      %s20 = int_to_ptr.hbm [resolvable:$true] %s19
      %s21 = sshll.u32 [#allocation3], 4
      %s22 = int_to_ptr.vmem [resolvable:$true] %s21
      %27 = dma.hbm_to_vmem [thread:$0]  %s20, 2048, %s22, [#allocation4], 256, 256, 16
    $region9: #{model_forward.3} parent=1 // pred_fallthru
      _
    // Predicated region
    $region10: #{model_forward.3} parent=1 // pred_check
      _
    $region11: #{model_forward.3} parent=1 // pred_check_branch
      %29 = sbr.rel (0) target = $region13
    $region12: #{model_forward.3} parent=1 // pred_region
      %31 = vsyncadd [#allocation6], 0
      %s33 = sshll.u32 %s2, 4
      %s34 = int_to_ptr.hbm [resolvable:$true] %s33
      %s35 = sshll.u32 [#allocation5], 4
      %s36 = int_to_ptr.vmem [resolvable:$true] %s35
      %38 = dma.hbm_to_vmem [thread:$0]  %s34, 16, %s36, [#allocation6]
    $region13: #{model_forward.3} parent=1 // pred_fallthru
      _
    // Predicated region
    $region14: #{model_forward.3} parent=1 // pred_check
      _
    $region15: #{model_forward.3} parent=1 // pred_check_branch
      %40 = sbr.rel (0) target = $region17
    $region16: #{model_forward.3} parent=1 // pred_region
      _
    $region17: #{model_forward.3} parent=1 // pred_fallthru
      _
    // Predicated region
    $region18: #{model_forward.3} parent=1 // pred_check
      _
    $region19: #{model_forward.3} parent=1 // pred_check_branch
      %42 = sbr.rel (0) target = $region21
    $region20: #{model_forward.3} parent=1 // pred_region
      %44 = dma.done [#allocation4], 2048
    $region21: #{model_forward.3} parent=1 // pred_fallthru
      _
    // Predicated region
    $region22: #{model_forward.3} parent=1 // pred_check
      _
    $region23: #{model_forward.3} parent=1 // pred_check_branch
      %46 = sbr.rel (0) target = $region25
    $region24: #{model_forward.3} parent=1 // pred_region
      %48 = dma.done [#allocation6], 16
    $region25: #{model_forward.3} parent=1 // pred_fallthru
      _
    %v49 = vld [vmem:[#allocation3] sm:$0xff]
    %v50 = vld [vmem:[#allocation3 + $0x8] sm:$0xff]
    %v51 = vld [vmem:[#allocation3 + $0x10] sm:$0xff]
    %v52 = vld [vmem:[#allocation3 + $0x18] sm:$0xff]
    %v53 = vld [vmem:[#allocation3 + $0x20] sm:$0xff]
    %v54 = vld [vmem:[#allocation3 + $0x28] sm:$0xff]
    %v55 = vld [vmem:[#allocation3 + $0x30] sm:$0xff]
    %v56 = vld [vmem:[#allocation3 + $0x38] sm:$0xff]
    %v57 = vld [vmem:[#allocation3 + $0x40] sm:$0xff]
    %v58 = vld [vmem:[#allocation3 + $0x48] sm:$0xff]
    %v59 = vld [vmem:[#allocation3 + $0x50] sm:$0xff]
    %v60 = vld [vmem:[#allocation3 + $0x58] sm:$0xff]
    %v61 = vld [vmem:[#allocation3 + $0x60] sm:$0xff]
    %v62 = vld [vmem:[#allocation3 + $0x68] sm:$0xff]
    %v63 = vld [vmem:[#allocation3 + $0x70] sm:$0xff]
    %v64 = vld [vmem:[#allocation3 + $0x78] sm:$0xff]
    loop: start=0, step=1, limit=16
    $region26: #{model_forward.3} parent=1 // loop_pre_header
      _
    $region27: #{model_forward.3} parent=1 // loop_header
      %s66 = sphi 0, %s70
      %p67 = scmp.ge.s32.totalorder %s66, 16
      %v71 = vphi 0.0, %v174
      %v72 = vphi 0.0, %v172
    $region28: #{model_forward.3} parent=1 // loop_header_branch
      %69 = sbr.rel (%p67) target = $region32
    $region29: #{model_forward.3} parent=1 // loop_body
      %s73 = smul.u32 %s66, 2
      %s74 = smul.addr %s73, 4
      %s75 = scalar_lea.vmem %s0, %s74
      %v76 = vld [vmem:[%s75] sm:$0xff]
      %v77 = vunpack.c.l.bf16 %v76
      %v78 = vunpack.c.h.bf16 %v76
      %80 = vrot.lane.b32.xlu0 %v71, 64
      %v81 = vpop.permute.xlu0 %80
      %vm82 = vcmask 523264
      %v83 = vsel %vm82, %v81, 0
      %85 = vmatpush.msra.mxu0 0.0
      %86 = vmatpush.msra.mxu0 0.0
      %87 = vmatpush.msra.mxu0 0.0
      %88 = vmatpush.msra.mxu0 0.0
      %89 = vmatpush.msra.mxu0 0.0
      %90 = vmatpush.msra.mxu0 0.0
      %91 = vmatpush.msra.mxu0 0.0
      %92 = vmatpush.msra.mxu0 0.0
      %93 = vmatpush.msra.mxu0 %v63
      %94 = vmatpush.msra.mxu0 %v61
      %95 = vmatpush.msra.mxu0 %v59
      %96 = vmatpush.msra.mxu0 %v57
      %97 = vmatpush.msra.mxu0 %v55
      %98 = vmatpush.msra.mxu0 %v53
      %99 = vmatpush.msra.mxu0 %v51
      %100 = vmatpush.msra.mxu0 %v49
      %101 = vmatmul.f32.gmra.mxu0 %v83
      %v102 = vpop.f32.mrf.mxu0
      %v103 = vadd.f32 0.0, %v102
      %104 = vdwg.mxu0
      %105 = vmatpush.msra.mxu0 0.0
      %106 = vmatpush.msra.mxu0 0.0
      %107 = vmatpush.msra.mxu0 0.0
      %108 = vmatpush.msra.mxu0 0.0
      %109 = vmatpush.msra.mxu0 0.0
      %110 = vmatpush.msra.mxu0 0.0
      %111 = vmatpush.msra.mxu0 0.0
      %112 = vmatpush.msra.mxu0 0.0
      %113 = vmatpush.msra.mxu0 %v64
      %114 = vmatpush.msra.mxu0 %v62
      %115 = vmatpush.msra.mxu0 %v60
      %116 = vmatpush.msra.mxu0 %v58
      %117 = vmatpush.msra.mxu0 %v56
      %118 = vmatpush.msra.mxu0 %v54
      %119 = vmatpush.msra.mxu0 %v52
      %120 = vmatpush.msra.mxu0 %v50
      %121 = vmatmul.f32.gmra.mxu0 %v83
      %v122 = vpop.f32.mrf.mxu0
      %v123 = vadd.f32 0.0, %v122
      %124 = vdwg.mxu0
      %v125 = vadd.f32 %v77, %v103
      %v126 = vadd.f32 %v78, %v123
      %v127 = vxor.u32 %v125, 2147483648
      %v128 = vmul.f32 %v127, 1.442695
      %v129 = vpow.pop %v128
      %v130 = vadd.f32 %v129, 1.0
      %v131 = vrcp.pop %v130
      %v132 = vmul.f32 %v130, %v131
      %v133 = vsub.f32 1.0, %v132
      %v134 = vmul.f32 %v131, %v133
      %v135 = vadd.f32 %v131, %v134
      %vm136 = vweird.f32 %v130
      %vm137 = vweird.f32 %v131
      %vm138 = vmor %vm136, %vm137
      %v139 = vsel %vm138, %v131, %v135
      %v140 = vand.u32 2147483647, %v130
      %vm141 = vcmp.eq.f32.partialorder %v140, 8.507059e+37
      %v142 = vand.u32 %v130, 2147483648
      %v143 = vor.u32 1.1754944e-38, %v142
      %v144 = vsel %vm141, %v143, %v139
      %v145 = vmul.f32 1.0, %v144
      %v146 = vtanh.pop %v126
      %v147 = vxor.u32 %v126, 2147483648
      %v148 = vmul.f32 %v147, 1.442695
      %v149 = vpow.pop %v148
      %v150 = vadd.f32 %v149, 1.0
      %v151 = vrcp.pop %v150
      %v152 = vmul.f32 %v150, %v151
      %v153 = vsub.f32 1.0, %v152
      %v154 = vmul.f32 %v151, %v153
      %v155 = vadd.f32 %v151, %v154
      %vm156 = vweird.f32 %v150
      %vm157 = vweird.f32 %v151
      %vm158 = vmor %vm156, %vm157
      %v159 = vsel %vm158, %v151, %v155
      %v160 = vand.u32 2147483647, %v150
      %vm161 = vcmp.eq.f32.partialorder %v160, 8.507059e+37
      %v162 = vand.u32 %v150, 2147483648
      %v163 = vor.u32 1.1754944e-38, %v162
      %v164 = vsel %vm161, %v163, %v159
      %v165 = vmul.f32 1.0, %v164
      %v166 = vmul.f32 %v145, %v72
      %v167 = vmul.f32 %v145, %v146
      %169 = vrot.lane.b32.xlu0 %v167, 64
      %v170 = vpop.permute.xlu0 %169
      %v172 = vadd.f32 %v166, %v170
      %v173 = vtanh.pop %v172
      %v174 = vmul.f32 %v165, %v173
    $region30: #{model_forward.3} parent=1 // loop_footer
      %s70 = sadd.s32 1, %s66
    $region31: #{model_forward.3} parent=1 // loop_footer_branch
      %65 = sbr.rel target = $region27
    $region32: #{model_forward.3} parent=1 // loop_exit
      _
    %v175 = vld [vmem:[#allocation5] sm:$0x1]
    %v177 = vperm.slane %v175, 0
    %178 = vrot.lane.b32.xlu0 %v177, 64
    %v179 = vpop.permute.xlu0 %178
    %v181 = vmul.f32 %v71, %v179
    %183 = vrot.lane.b32.xlu0 %v181, 64
    %v184 = vpop.permute.xlu0 %183
    %vm186 = vcmask 523264
    %v187 = vsel %vm186, %v184, 0.0
    %188 = vadd.xlane.f32.xlu0 %v187
    %v189 = vpop.xlane.xlu0 %188
    %v190 = vld [vmem:[#allocation2] sm:$0x1]
    %v192 = vperm.slane %v190, 0
    %v194 = vadd.f32 %v189, %v192
    %v195 = vxor.u32 %v194, 2147483648
    %v196 = vmul.f32 %v195, 1.442695
    %v197 = vpow.pop %v196
    %v198 = vadd.f32 %v197, 1.0
    %v199 = vrcp.pop %v198
    %v200 = vmul.f32 %v198, %v199
    %v201 = vsub.f32 1.0, %v200
    %v202 = vmul.f32 %v199, %v201
    %v203 = vadd.f32 %v199, %v202
    %vm204 = vweird.f32 %v198
    %vm205 = vweird.f32 %v199
    %vm206 = vmor %vm204, %vm205
    %v207 = vsel %vm206, %v199, %v203
    %v208 = vand.u32 2147483647, %v198
    %vm209 = vcmp.eq.f32.partialorder %v208, 8.507059e+37
    %v210 = vand.u32 %v198, 2147483648
    %v211 = vor.u32 1.1754944e-38, %v210
    %v212 = vsel %vm209, %v211, %v207
    %v213 = vmul.f32 1.0, %v212
    %vm214 = vcmask 7168
    %215 = vst.msk [vmem:[%s4] sm:$0xff] %vm214, %v213
    // Predicated region
    $region33: #{model_forward.3} parent=1 // pred_check
      _
    $region34: #{model_forward.3} parent=1 // pred_check_branch
      %217 = sbr.rel (0) target = $region36
    $region35: #{model_forward.3} parent=1 // pred_region
      _
    $region36: #{model_forward.3} parent=1 // pred_fallthru
      _
    // Predicated region
    $region37: #{model_forward.3} parent=1 // pred_check
      _
    $region38: #{model_forward.3} parent=1 // pred_check_branch
      %219 = sbr.rel (0) target = $region40
    $region39: #{model_forward.3} parent=1 // pred_region
      _
    $region40: #{model_forward.3} parent=1 // pred_fallthru
      _
    %220 = vsyncpa [#allocation4], 1
    %221 = vsyncpa [#allocation6], 1

// kernel: model_forward.2
$region0: #{model_forward.2}
  #allocation0 [shape = 'u32[]', space=smem, size = 0x4, offset = 0x4, fixed_abs, tag = 'smem constant byte address 0x4 - core index']
  #allocation1 [shape = 'u32[72,128]{1,0:T(1,128)}', space=vmem, size = 0x9000, scoped, tag = 'internal scratch']
  %s0 = inlined_call_operand.vmem [shape: bf16[128,128], index: 0, kind: input, shape index: {}]
  %s1 = inlined_call_operand.vmem [shape: bf16[128,256], index: 1, kind: input, shape index: {}]
  %s2 = inlined_call_operand.hbm [shape: f32[1,256], index: 2, kind: input, shape index: {}]
  %s3 = inlined_call_operand.vmem [shape: bf16[128,256], index: 3, kind: output, shape index: {}]
  %s4 = sld [smem:[#allocation0]]
  $region26: #{model_forward.2} parent=0
    _
  %s6 = ssub.s32 1, %s4
  %s7 = scalar_select 0, %s6, %s4
  $region1: #{model_forward.2} parent=0
    #allocation2 [shape = 'u8[1024]{0}', space=vmem, size = 0x400, scoped, tag = 'input window, operand 2, single buffered']
    #allocation3 [shape = 's32[1]{0}', space=sflag, size = 0x4, scoped, tag = 'scoped memory for model_forward.2']
    %8 = vsyncpa [#allocation3], 0
    // Predicated region
    $region2: #{model_forward.2} parent=1 // pred_check
      _
    $region3: #{model_forward.2} parent=1 // pred_check_branch
      %10 = sbr.rel (0) target = $region5
    $region4: #{model_forward.2} parent=1 // pred_region
      _
    $region5: #{model_forward.2} parent=1 // pred_fallthru
      _
    // Predicated region
    $region6: #{model_forward.2} parent=1 // pred_check
      _
    $region7: #{model_forward.2} parent=1 // pred_check_branch
      %12 = sbr.rel (0) target = $region9
    $region8: #{model_forward.2} parent=1 // pred_region
      _
    $region9: #{model_forward.2} parent=1 // pred_fallthru
      _
    // Predicated region
    $region10: #{model_forward.2} parent=1 // pred_check
      _
    $region11: #{model_forward.2} parent=1 // pred_check_branch
      %14 = sbr.rel (0) target = $region13
    $region12: #{model_forward.2} parent=1 // pred_region
      %16 = vsyncadd [#allocation3], 0
      %s18 = sshll.u32 %s2, 4
      %s19 = int_to_ptr.hbm [resolvable:$true] %s18
      %s20 = sshll.u32 [#allocation2], 4
      %s21 = int_to_ptr.vmem [resolvable:$true] %s20
      %23 = dma.hbm_to_vmem [thread:$0]  %s19, 32, %s21, [#allocation3]
    $region13: #{model_forward.2} parent=1 // pred_fallthru
      _
    // Predicated region
    $region14: #{model_forward.2} parent=1 // pred_check
      _
    $region15: #{model_forward.2} parent=1 // pred_check_branch
      %25 = sbr.rel (0) target = $region17
    $region16: #{model_forward.2} parent=1 // pred_region
      %27 = dma.done [#allocation3], 32
    $region17: #{model_forward.2} parent=1 // pred_fallthru
      _
    %v28 = vld [vmem:[%s0] sm:$0xf]
    %v29 = vld [vmem:[%s0 + $0x4] sm:$0xf]
    %v30 = vld [vmem:[%s0 + $0x8] sm:$0xf]
    %v31 = vld [vmem:[%s0 + $0xc] sm:$0xf]
    %v32 = vld [vmem:[%s0 + $0x10] sm:$0xf]
    %v33 = vld [vmem:[%s0 + $0x14] sm:$0xf]
    %v34 = vld [vmem:[%s0 + $0x18] sm:$0xf]
    %v35 = vld [vmem:[%s0 + $0x1c] sm:$0xf]
    %v36 = vld [vmem:[%s0 + $0x20] sm:$0xf]
    %v37 = vld [vmem:[%s0 + $0x24] sm:$0xf]
    %v38 = vld [vmem:[%s0 + $0x28] sm:$0xf]
    %v39 = vld [vmem:[%s0 + $0x2c] sm:$0xf]
    %v40 = vld [vmem:[%s0 + $0x30] sm:$0xf]
    %v41 = vld [vmem:[%s0 + $0x34] sm:$0xf]
    %v42 = vld [vmem:[%s0 + $0x38] sm:$0xf]
    %v43 = vld [vmem:[%s0 + $0x3c] sm:$0xf]
    %v44 = vld [vmem:[%s1] sm:$0xff]
    %v45 = vld [vmem:[%s1 + $0x8] sm:$0xff]
    %v46 = vld [vmem:[%s1 + $0x10] sm:$0xff]
    %v47 = vld [vmem:[%s1 + $0x18] sm:$0xff]
    %v48 = vld [vmem:[%s1 + $0x20] sm:$0xff]
    %v49 = vld [vmem:[%s1 + $0x28] sm:$0xff]
    %v50 = vld [vmem:[%s1 + $0x30] sm:$0xff]
    %v51 = vld [vmem:[%s1 + $0x38] sm:$0xff]
    %v52 = vld [vmem:[%s1 + $0x40] sm:$0xff]
    %v53 = vld [vmem:[%s1 + $0x48] sm:$0xff]
    %v54 = vld [vmem:[%s1 + $0x50] sm:$0xff]
    %v55 = vld [vmem:[%s1 + $0x58] sm:$0xff]
    %v56 = vld [vmem:[%s1 + $0x60] sm:$0xff]
    %v57 = vld [vmem:[%s1 + $0x68] sm:$0xff]
    %v58 = vld [vmem:[%s1 + $0x70] sm:$0xff]
    %v59 = vld [vmem:[%s1 + $0x78] sm:$0xff]
    %v60 = vld [vmem:[#allocation2] sm:$0x3]
    %v62 = vperm.slane %v60, 0
    %v63 = vperm.slane %v60, 1
    %v82 = vunpack.c.l.b16 %v28
    %v83 = vunpack.c.l.b16 %v29
    %v84 = vunpack.c.l.b16 %v30
    %v85 = vunpack.c.l.b16 %v31
    %v86 = vunpack.c.l.b16 %v32
    %v87 = vunpack.c.l.b16 %v33
    %v88 = vunpack.c.l.b16 %v34
    %v89 = vunpack.c.l.b16 %v35
    %v90 = vunpack.c.l.b16 %v36
    %v91 = vunpack.c.l.b16 %v37
    %v92 = vunpack.c.l.b16 %v38
    %v93 = vunpack.c.l.b16 %v39
    %v94 = vunpack.c.l.b16 %v40
    %v95 = vunpack.c.l.b16 %v41
    %v96 = vunpack.c.l.b16 %v42
    %v97 = vunpack.c.l.b16 %v43
    %v98 = vpack.c.b16 %v83, %v82
    %v99 = vpack.c.b16 %v85, %v84
    %v100 = vpack.c.b16 %v87, %v86
    %v101 = vpack.c.b16 %v89, %v88
    %v102 = vpack.c.b16 %v91, %v90
    %v103 = vpack.c.b16 %v93, %v92
    %v104 = vpack.c.b16 %v95, %v94
    %v105 = vpack.c.b16 %v97, %v96
    %v130 = vunpack.c.l.b16 %v44
    %v131 = vunpack.c.h.b16 %v44
    %v132 = vunpack.c.l.b16 %v45
    %v133 = vunpack.c.h.b16 %v45
    %v134 = vunpack.c.l.b16 %v46
    %v135 = vunpack.c.h.b16 %v46
    %v136 = vunpack.c.l.b16 %v47
    %v137 = vunpack.c.h.b16 %v47
    %v138 = vunpack.c.l.b16 %v48
    %v139 = vunpack.c.h.b16 %v48
    %v140 = vunpack.c.l.b16 %v49
    %v141 = vunpack.c.h.b16 %v49
    %v142 = vunpack.c.l.b16 %v50
    %v143 = vunpack.c.h.b16 %v50
    %v144 = vunpack.c.l.b16 %v51
    %v145 = vunpack.c.h.b16 %v51
    %v146 = vunpack.c.l.b16 %v52
    %v147 = vunpack.c.h.b16 %v52
    %v148 = vunpack.c.l.b16 %v53
    %v149 = vunpack.c.h.b16 %v53
    %v150 = vunpack.c.l.b16 %v54
    %v151 = vunpack.c.h.b16 %v54
    %v152 = vunpack.c.l.b16 %v55
    %v153 = vunpack.c.h.b16 %v55
    %v154 = vunpack.c.l.b16 %v56
    %v155 = vunpack.c.h.b16 %v56
    %v156 = vunpack.c.l.b16 %v57
    %v157 = vunpack.c.h.b16 %v57
    %v158 = vunpack.c.l.b16 %v58
    %v159 = vunpack.c.h.b16 %v58
    %v160 = vunpack.c.l.b16 %v59
    %v161 = vunpack.c.h.b16 %v59
    %v162 = vpack.c.b16 %v132, %v130
    %v163 = vpack.c.b16 %v133, %v131
    %v164 = vpack.c.b16 %v136, %v134
    %v165 = vpack.c.b16 %v137, %v135
    %v166 = vpack.c.b16 %v140, %v138
    %v167 = vpack.c.b16 %v141, %v139
    %v168 = vpack.c.b16 %v144, %v142
    %v169 = vpack.c.b16 %v145, %v143
    %v170 = vpack.c.b16 %v148, %v146
    %v171 = vpack.c.b16 %v149, %v147
    %v172 = vpack.c.b16 %v152, %v150
    %v173 = vpack.c.b16 %v153, %v151
    %v174 = vpack.c.b16 %v156, %v154
    %v175 = vpack.c.b16 %v157, %v155
    %v176 = vpack.c.b16 %v160, %v158
    %v177 = vpack.c.b16 %v161, %v159
    %194 = vmatpush.bf16.msra.mxu0 %v176
    %195 = vmatpush.bf16.msra.mxu0 %v174
    %196 = vmatpush.bf16.msra.mxu0 %v172
    %197 = vmatpush.bf16.msra.mxu0 %v170
    %198 = vmatpush.bf16.msra.mxu0 %v168
    %199 = vmatpush.bf16.msra.mxu0 %v166
    %200 = vmatpush.bf16.msra.mxu0 %v164
    %201 = vmatpush.bf16.msra.mxu0 %v162
    %202 = vmatmul.bf16.gmra.mxu0 %v98
    %v203 = vpop.f32.mrf.mxu0
    %v204 = vadd.f32 %v62, %v203
    %v205 = vpop.f32.mrf.mxu0
    %v206 = vadd.f32 %v62, %v205
    %207 = vmatmul.bf16.gmra.mxu0 %v99
    %v208 = vpop.f32.mrf.mxu0
    %v209 = vadd.f32 %v62, %v208
    %v210 = vpop.f32.mrf.mxu0
    %v211 = vadd.f32 %v62, %v210
    %212 = vmatmul.bf16.gmra.mxu0 %v100
    %v213 = vpop.f32.mrf.mxu0
    %v214 = vadd.f32 %v62, %v213
    %v215 = vpop.f32.mrf.mxu0
    %v216 = vadd.f32 %v62, %v215
    %217 = vmatmul.bf16.gmra.mxu0 %v101
    %v218 = vpop.f32.mrf.mxu0
    %v219 = vadd.f32 %v62, %v218
    %v220 = vpop.f32.mrf.mxu0
    %v221 = vadd.f32 %v62, %v220
    %222 = vmatmul.bf16.gmra.mxu0 %v102
    %v223 = vpop.f32.mrf.mxu0
    %v224 = vadd.f32 %v62, %v223
    %v225 = vpop.f32.mrf.mxu0
    %v226 = vadd.f32 %v62, %v225
    %227 = vmatmul.bf16.gmra.mxu0 %v103
    %v228 = vpop.f32.mrf.mxu0
    %v229 = vadd.f32 %v62, %v228
    %v230 = vpop.f32.mrf.mxu0
    %v231 = vadd.f32 %v62, %v230
    %232 = vmatmul.bf16.gmra.mxu0 %v104
    %v233 = vpop.f32.mrf.mxu0
    %v234 = vadd.f32 %v62, %v233
    %v235 = vpop.f32.mrf.mxu0
    %v236 = vadd.f32 %v62, %v235
    %237 = vmatmul.bf16.gmra.mxu0 %v105
    %v238 = vpop.f32.mrf.mxu0
    %v239 = vadd.f32 %v62, %v238
    %v240 = vpop.f32.mrf.mxu0
    %v241 = vadd.f32 %v62, %v240
    %242 = vdwg.mxu0
    %243 = vmatpush.bf16.msra.mxu0 %v177
    %244 = vmatpush.bf16.msra.mxu0 %v175
    %245 = vmatpush.bf16.msra.mxu0 %v173
    %246 = vmatpush.bf16.msra.mxu0 %v171
    %247 = vmatpush.bf16.msra.mxu0 %v169
    %248 = vmatpush.bf16.msra.mxu0 %v167
    %249 = vmatpush.bf16.msra.mxu0 %v165
    %250 = vmatpush.bf16.msra.mxu0 %v163
    %251 = vmatmul.bf16.gmra.mxu0 %v98
    %v252 = vpop.f32.mrf.mxu0
    %v253 = vadd.f32 %v63, %v252
    %v254 = vpop.f32.mrf.mxu0
    %v255 = vadd.f32 %v63, %v254
    %256 = vmatmul.bf16.gmra.mxu0 %v99
    %v257 = vpop.f32.mrf.mxu0
    %v258 = vadd.f32 %v63, %v257
    %v259 = vpop.f32.mrf.mxu0
    %v260 = vadd.f32 %v63, %v259
    %261 = vmatmul.bf16.gmra.mxu0 %v100
    %v262 = vpop.f32.mrf.mxu0
    %v263 = vadd.f32 %v63, %v262
    %v264 = vpop.f32.mrf.mxu0
    %v265 = vadd.f32 %v63, %v264
    %266 = vmatmul.bf16.gmra.mxu0 %v101
    %v267 = vpop.f32.mrf.mxu0
    %v268 = vadd.f32 %v63, %v267
    %v269 = vpop.f32.mrf.mxu0
    %v270 = vadd.f32 %v63, %v269
    %271 = vmatmul.bf16.gmra.mxu0 %v102
    %v272 = vpop.f32.mrf.mxu0
    %v273 = vadd.f32 %v63, %v272
    %v274 = vpop.f32.mrf.mxu0
    %v275 = vadd.f32 %v63, %v274
    %276 = vmatmul.bf16.gmra.mxu0 %v103
    %v277 = vpop.f32.mrf.mxu0
    %v278 = vadd.f32 %v63, %v277
    %v279 = vpop.f32.mrf.mxu0
    %v280 = vadd.f32 %v63, %v279
    %281 = vmatmul.bf16.gmra.mxu0 %v104
    %v282 = vpop.f32.mrf.mxu0
    %v283 = vadd.f32 %v63, %v282
    %v284 = vpop.f32.mrf.mxu0
    %v285 = vadd.f32 %v63, %v284
    %286 = vmatmul.bf16.gmra.mxu0 %v105
    %v287 = vpop.f32.mrf.mxu0
    %v288 = vadd.f32 %v63, %v287
    %v289 = vpop.f32.mrf.mxu0
    %v290 = vadd.f32 %v63, %v289
    %291 = vdwg.mxu0
    %v292 = vpack.c.bf16 %v253, %v204
    %v293 = vpack.c.bf16 %v255, %v206
    %v294 = vpack.c.bf16 %v258, %v209
    %v295 = vpack.c.bf16 %v260, %v211
    %v296 = vpack.c.bf16 %v263, %v214
    %v297 = vpack.c.bf16 %v265, %v216
    %v298 = vpack.c.bf16 %v268, %v219
    %v299 = vpack.c.bf16 %v270, %v221
    %v300 = vpack.c.bf16 %v273, %v224
    %v301 = vpack.c.bf16 %v275, %v226
    %v302 = vpack.c.bf16 %v278, %v229
    %v303 = vpack.c.bf16 %v280, %v231
    %v304 = vpack.c.bf16 %v283, %v234
    %v305 = vpack.c.bf16 %v285, %v236
    %v306 = vpack.c.bf16 %v288, %v239
    %v307 = vpack.c.bf16 %v290, %v241
    %308 = vst [vmem:[%s3] sm:$0xff] %v292
    %309 = vst [vmem:[%s3 + $0x8] sm:$0xff] %v293
    %310 = vst [vmem:[%s3 + $0x10] sm:$0xff] %v294
    %311 = vst [vmem:[%s3 + $0x18] sm:$0xff] %v295
    %312 = vst [vmem:[%s3 + $0x20] sm:$0xff] %v296
    %313 = vst [vmem:[%s3 + $0x28] sm:$0xff] %v297
    %314 = vst [vmem:[%s3 + $0x30] sm:$0xff] %v298
    %315 = vst [vmem:[%s3 + $0x38] sm:$0xff] %v299
    %316 = vst [vmem:[%s3 + $0x40] sm:$0xff] %v300
    %317 = vst [vmem:[%s3 + $0x48] sm:$0xff] %v301
    %318 = vst [vmem:[%s3 + $0x50] sm:$0xff] %v302
    %319 = vst [vmem:[%s3 + $0x58] sm:$0xff] %v303
    %320 = vst [vmem:[%s3 + $0x60] sm:$0xff] %v304
    %321 = vst [vmem:[%s3 + $0x68] sm:$0xff] %v305
    %322 = vst [vmem:[%s3 + $0x70] sm:$0xff] %v306
    %323 = vst [vmem:[%s3 + $0x78] sm:$0xff] %v307
    // Predicated region
    $region18: #{model_forward.2} parent=1 // pred_check
      _
    $region19: #{model_forward.2} parent=1 // pred_check_branch
      %325 = sbr.rel (0) target = $region21
    $region20: #{model_forward.2} parent=1 // pred_region
      _
    $region21: #{model_forward.2} parent=1 // pred_fallthru
      _
    // Predicated region
    $region22: #{model_forward.2} parent=1 // pred_check
      _
    $region23: #{model_forward.2} parent=1 // pred_check_branch
      %327 = sbr.rel (0) target = $region25
    $region24: #{model_forward.2} parent=1 // pred_region
      _
    $region25: #{model_forward.2} parent=1 // pred_fallthru
      _
    %328 = vsyncpa [#allocation3], 1

</llo_original>
